<compile_context>
chip_gen: v7x
topology: tpu7x:2x2x1
jax: 0.10.0
libtpu: 0.0.40
codegen_flags: <defaults>
</compile_context>

<pallas_src>
import jax
import jax.numpy as jnp
from jax import lax
from jax.scipy.special import gammaln, logsumexp
from jax.experimental import pallas as pl
from jax.experimental.pallas import tpu as pltpu

# ----------------------- configuration (small synthetic sizes) -----------------------
B = 2                       # batch
C, H, W = 4, 16, 16         # NCHW input
IN_DIM = C * H * W          # flattened input to synthetic backbone (1024)
DATA_DIM = 16               # backbone.feature_size
HIDDEN = 32                 # hidden_layers = [32]
LATENT = 8                  # latent_dim
NUM_CLASSES = 3
K1 = NUM_CLASSES + 1        # components + "new cluster" component
ALPHA = 1.0


# --------------------------------- Pallas kernel -------------------------------------
def protodpmm_kernel(x_ref, w01t_ref, b01_ref, w2l_ref, off_ref, sel_ref,
                     const_ref, out_ref):
    # fused backbone + encoder-layer-0 Linear.  x is cast to bf16 in-register so both MXU
    # operands are bf16 with the 1024-deep contraction on the lane (last) axis; f32 accumulate.
    xb = x_ref[...].astype(jnp.bfloat16)                                 # (TB, IN_DIM) bf16
    feats = lax.dot_general(
        xb, w01t_ref[...],
        dimension_numbers=(((1,), (1,)), ((), ())),
        preferred_element_type=jnp.float32) + b01_ref[...]               # (TB, HIDDEN) f32
    h = jnp.tanh(feats)

    # encoder-layer-1 Linear folded with the per-component precision-Cholesky factors:
    # Y[:, k*D+j] = sum_i (z - mu_k)[:, i] * chol_k[i, j]  computed as one lane-wide matmul.
    y = jnp.dot(h, w2l_ref[...],
                preferred_element_type=jnp.float32) + off_ref[...]       # (TB, K1*LATENT)

    # per-component Mahalanobis distance via a block-diagonal selector matmul (no relayout).
    maha = jnp.dot(y * y, sel_ref[...],
                   preferred_element_type=jnp.float32)                   # (TB, K1)

    # const rows: [0] = p_z.logits + gammaln(t) - gammaln(df/2) - (D/2)log(df*pi) - 0.5*logdet
    #             [1] = t = 0.5*(df + D),  [2] = 1/df
    base = const_ref[0:1, :]
    t = const_ref[1:2, :]
    inv_df = const_ref[2:3, :]
    out_ref[...] = base - t * jnp.log1p(inv_df * maha)


# --------------------------- parameter / buffer construction -------------------------
def _diag_embed(v):
    return v[..., :, None] * jnp.eye(v.shape[-1], dtype=v.dtype)


def _positive_definite_transform(x):
    # torch.distributions.transforms.PositiveDefiniteTransform:
    #   L = tril(x, -1) + diag_embed(exp(diag(x)));  return L @ L^T
    d = jnp.diagonal(x, axis1=-2, axis2=-1)
    L = jnp.tril(x, -1) + _diag_embed(jnp.exp(d))
    return L @ jnp.swapaxes(L, -1, -2)


def make_params(key):
    ks = jax.random.split(key, 4)
    # Kaiming-normal-ish deterministic init, biases zero (as in the module).
    wb = jax.random.normal(ks[0], (IN_DIM, DATA_DIM), jnp.float32) * (2.0 / IN_DIM) ** 0.5
    bb = jnp.zeros((1, DATA_DIM), jnp.float32)
    w1 = jax.random.normal(ks[1], (DATA_DIM, HIDDEN), jnp.float32) * (2.0 / DATA_DIM) ** 0.5
    b1 = jnp.zeros((1, HIDDEN), jnp.float32)
    w2 = jax.random.normal(ks[2], (HIDDEN, LATENT), jnp.float32) * (2.0 / HIDDEN) ** 0.5
    b2 = jnp.zeros((1, LATENT), jnp.float32)
    prior_means = jax.random.uniform(ks[3], (NUM_CLASSES, LATENT), jnp.float32)  # torch.rand

    # --- DPMM buffers / derived MultivariateT parameters (module __init__ state) ---
    D = LATENT
    nu0 = jnp.exp(jnp.float32(1.0))          # lognu0 = 1.0
    kappa0 = jnp.exp(jnp.float32(1.0))       # logkappa0 = 1.0
    Sigma0 = jnp.eye(D, dtype=jnp.float32) * (nu0 + D + 1.0)   # Sigmabar = I
    Nvec = jnp.zeros((NUM_CLASSES,), jnp.float32)
    prior_logits = (ALPHA / NUM_CLASSES) * jnp.ones((NUM_CLASSES,), jnp.float32)
    prior_covs = jnp.tile(jnp.eye(D, dtype=jnp.float32)[None], (NUM_CLASSES, 1, 1))

    # p_z: torch Categorical normalizes logits
    raw = jnp.concatenate([prior_logits, jnp.log(jnp.array([ALPHA], jnp.float32))], 0)
    pz_logits = raw - logsumexp(raw)

    # p_x_given_z (MultivariateT)
    nus = jnp.concatenate([Nvec + nu0, nu0[None]], 0)
    kappas = jnp.concatenate([Nvec + kappa0, kappa0[None]], 0)
    factors = (kappas + 1.0) / (kappas * (nus - D + 1.0))
    mus = jnp.concatenate([prior_means, jnp.zeros((1, D), jnp.float32)], 0)      # (K1, D)
    covs = jnp.concatenate([prior_covs, Sigma0[None]], 0)                        # (K1, D, D)
    scale = factors[:, None, None] * covs

    # MultivariateT.__init__: cholesky(inv(scale)); with these defaults scale is
    # negative-definite, so torch falls back to cholesky(PositiveDefiniteTransform(inv(scale))).
    inv_scale = jnp.linalg.inv(scale)
    chol_direct = jnp.linalg.cholesky(inv_scale)                    # NaN where not PD
    chol_fallback = jnp.linalg.cholesky(_positive_definite_transform(inv_scale))
    use_fallback = jnp.logical_not(jnp.all(jnp.isfinite(chol_direct)))
    prec_chol = jnp.where(use_fallback, chol_fallback, chol_direct)  # (K1, D, D)
    logdet = jnp.linalg.slogdet(scale)[1]                            # (K1,) logabsdet

    df = nus
    t = 0.5 * (df + D)
    A = gammaln(t)
    Bt = gammaln(0.5 * df)
    Ct = (D / 2.0) * jnp.log(df * jnp.pi)
    Dt = 0.5 * logdet
    base = pz_logits + A - Bt - Ct - Dt
    const = jnp.stack([base, t, 1.0 / df], 0).astype(jnp.float32)                # (3, K1)

    module = dict(wb=wb, bb=bb, w1=w1, b1=b1, w2=w2, b2=b2, mus=mus,
                  prec_chol=prec_chol, pz_logits=pz_logits, df=df, logdet=logdet)

    # ---- kernel parameters: all data-independent algebra folded at setup time ----
    w01 = wb @ w1                                  # (IN_DIM, HIDDEN) fused backbone+enc-L0
    b01 = bb @ w1 + b1                             # (1, HIDDEN)
    chol_flat = jnp.transpose(prec_chol, (1, 0, 2)).reshape(D, K1 * D)   # (D, K1*D)
    mu_chol = jnp.einsum('ki,kij->kj', mus, prec_chol).reshape(1, K1 * D)
    w2l = w2 @ chol_flat                           # (HIDDEN, K1*D) enc-L1 folded with chol
    off = b2 @ chol_flat - mu_chol                 # (1, K1*D)
    sel = jnp.repeat(jnp.eye(K1, dtype=jnp.float32), D, axis=0)          # (K1*D, K1)

    kernel = dict(
        w01t=jnp.transpose(w01).astype(jnp.bfloat16),  # (HIDDEN, IN_DIM): lane-dense, bf16
        b01=b01.astype(jnp.float32),
        w2l=w2l.astype(jnp.float32),
        off=off.astype(jnp.float32),
        sel=sel,
        const=const)
    return module, kernel


# ------------------------------------ wrapper -----------------------------------------
def protodpmm_forward(x_nchw, kp):
    bsz = x_nchw.shape[0]
    # layout plumbing only: NCHW -> (B, C*H*W).  Stays f32; the bf16 cast for the MXU happens
    # inside the kernel (avoids an extra wrapper-side HBM round trip on the only large input).
    x = x_nchw.reshape(bsz, -1)
    TB = bsz if bsz <= 256 else 256          # batch tile (256 on v6e/v7x; full batch here)
    grid = (pl.cdiv(bsz, TB),)

    def _const(shape):
        return pl.BlockSpec(shape, lambda i, _n=len(shape): (0,) * _n)

    return pl.pallas_call(
        protodpmm_kernel,
        out_shape=jax.ShapeDtypeStruct((bsz, K1), jnp.float32),
        grid=grid,
        in_specs=[
            pl.BlockSpec((TB, IN_DIM), lambda i: (i, 0)),     # x: tiled over batch
            _const((HIDDEN, IN_DIM)),                         # W01^T (bf16, VMEM-resident)
            _const((1, HIDDEN)),                              # b01
            _const((HIDDEN, K1 * LATENT)),                    # W2L
            _const((1, K1 * LATENT)),                         # off
            _const((K1 * LATENT, K1)),                        # block-diag selector
            _const((3, K1)),                                  # Student-T constants
        ],
        out_specs=pl.BlockSpec((TB, K1), lambda i: (i, 0)),
        compiler_params=pltpu.CompilerParams(dimension_semantics=("parallel",)),
    )(x, kp['w01t'], kp['b01'], kp['w2l'], kp['off'], kp['sel'], kp['const'])


# ----------------------------------- references ----------------------------------------
def reference_fused(x_nchw, kp):
    # identical math to the kernel (same bf16-quantized operands, fused params), pure jnp
    x = x_nchw.reshape(x_nchw.shape[0], -1).astype(jnp.bfloat16).astype(jnp.float32)
    w01 = kp['w01t'].astype(jnp.float32).T
    h = jnp.tanh(jnp.dot(x, w01) + kp['b01'])
    y = jnp.dot(h, kp['w2l']) + kp['off']
    maha = jnp.dot(y * y, kp['sel'])
    base, t, inv_df = kp['const'][0], kp['const'][1], kp['const'][2]
    return base[None] - t[None] * jnp.log1p(inv_df[None] * maha)


def reference_module(x_nchw, mp):
    # faithful all-f32, unfused transcription of ProtoDPMMNet.forward
    x = x_nchw.reshape(x_nchw.shape[0], -1).astype(jnp.float32)
    feats = x @ mp['wb'] + mp['bb']
    h = jnp.tanh(feats @ mp['w1'] + mp['b1'])
    z = h @ mp['w2'] + mp['b2']
    dev = z[:, None, :] - mp['mus'][None]
    y = jnp.einsum('nki,kij->nkj', dev, mp['prec_chol'])
    maha = jnp.sum(y * y, -1)
    df = mp['df']
    t = 0.5 * (df + LATENT)
    A = gammaln(t)
    Bt = gammaln(0.5 * df)
    Ct = (LATENT / 2.0) * jnp.log(df * jnp.pi)
    Dt = 0.5 * mp['logdet']
    E = -t[None] * jnp.log(1.0 + (1.0 / df)[None] * maha)
    return mp['pz_logits'][None] + (A - Bt - Ct - Dt)[None] + E


if __name__ == "__main__":
    key = jax.random.PRNGKey(0)
    kx, kparam = jax.random.split(key)
    x = jax.random.normal(kx, (B, C, H, W), jnp.float32)
    module_p, kernel_p = make_params(kparam)

    fwd = jax.jit(protodpmm_forward)
    lls = fwd(x, kernel_p)
    jax.block_until_ready(lls)

    assert lls.shape == (B, K1)
    assert bool(jnp.all(jnp.isfinite(lls)))

    with jax.default_matmul_precision("float32"):
        ref_fused = reference_fused(x, kernel_p)     # same quantization, fused math
        ref_mod = reference_module(x, module_p)      # faithful f32 module semantics

    # tight: kernel vs identical math outside Pallas
    assert bool(jnp.allclose(lls, ref_fused, rtol=2e-3, atol=2e-3)), (lls, ref_fused)
    # loose: kernel vs the unfused f32 module (bf16 backbone-matmul operands are the only approx.)
    assert bool(jnp.allclose(lls, ref_mod, rtol=5e-2, atol=1e-1)), (lls, ref_mod)

    print("KERNEL_OK")
</pallas_src>

<mosaic_0001>
module attributes {stable_mosaic.version = 11 : i64} {
  func.func @protodpmm_kernel(%arg0: i32, %arg1: memref<2x1024xf32, #tpu.memory_space<vmem>>, %arg2: memref<32x1024xbf16, #tpu.memory_space<vmem>>, %arg3: memref<1x32xf32, #tpu.memory_space<vmem>>, %arg4: memref<32x32xf32, #tpu.memory_space<vmem>>, %arg5: memref<1x32xf32, #tpu.memory_space<vmem>>, %arg6: memref<32x4xf32, #tpu.memory_space<vmem>>, %arg7: memref<3x4xf32, #tpu.memory_space<vmem>>, %arg8: memref<2x4xf32, #tpu.memory_space<vmem>>) attributes {dimension_semantics = [#tpu.dimension_semantics<parallel>], iteration_bounds = array<i64: 1>, scalar_prefetch = 0 : i64, scratch_operands = 0 : i64, tpu.core_type = #tpu.core_type<tc>, window_params = [{transform_indices = @transform_0, window_bounds = array<i64: 2, 1024>}, {pipeline_mode = #tpu.pipeline_mode<synchronous>, transform_indices = @transform_1, window_bounds = array<i64: 32, 1024>}, {pipeline_mode = #tpu.pipeline_mode<synchronous>, transform_indices = @transform_2, window_bounds = array<i64: 1, 32>}, {pipeline_mode = #tpu.pipeline_mode<synchronous>, transform_indices = @transform_3, window_bounds = array<i64: 32, 32>}, {pipeline_mode = #tpu.pipeline_mode<synchronous>, transform_indices = @transform_4, window_bounds = array<i64: 1, 32>}, {pipeline_mode = #tpu.pipeline_mode<synchronous>, transform_indices = @transform_5, window_bounds = array<i64: 32, 4>}, {pipeline_mode = #tpu.pipeline_mode<synchronous>, transform_indices = @transform_6, window_bounds = array<i64: 3, 4>}, {transform_indices = @transform_7, window_bounds = array<i64: 2, 4>}]} {
    %c0 = arith.constant 0 : index
    %c0_0 = arith.constant 0 : index
    %0 = vector.load %arg1[%c0, %c0_0] : memref<2x1024xf32, #tpu.memory_space<vmem>>, vector<2x1024xf32>
    %1 = arith.truncf %0 : vector<2x1024xf32> to vector<2x1024xbf16>
    %c0_1 = arith.constant 0 : index
    %c0_2 = arith.constant 0 : index
    %2 = vector.load %arg2[%c0_1, %c0_2] : memref<32x1024xbf16, #tpu.memory_space<vmem>>, vector<32x1024xbf16>
    %cst = arith.constant dense<0.000000e+00> : vector<2x32xf32>
    %3 = tpu.matmul %1, %2, %cst {dimension_numbers = #tpu.dot_dimension_numbers<[1], [1], [0], [0], [0, 0, 1, 0], [], []>} : vector<2x1024xbf16>, vector<32x1024xbf16>, vector<2x32xf32> -> vector<2x32xf32>
    %c0_3 = arith.constant 0 : index
    %c0_4 = arith.constant 0 : index
    %4 = vector.load %arg3[%c0_3, %c0_4] : memref<1x32xf32, #tpu.memory_space<vmem>>, vector<1x32xf32>
    %5 = vector.broadcast %4 : vector<1x32xf32> to vector<2x32xf32>
    %6 = arith.addf %3, %5 : vector<2x32xf32>
    %7 = math.tanh %6 : vector<2x32xf32>
    %c0_5 = arith.constant 0 : index
    %c0_6 = arith.constant 0 : index
    %8 = vector.load %arg4[%c0_5, %c0_6] : memref<32x32xf32, #tpu.memory_space<vmem>>, vector<32x32xf32>
    %cst_7 = arith.constant dense<0.000000e+00> : vector<2x32xf32>
    %9 = tpu.matmul %7, %8, %cst_7 {dimension_numbers = #tpu.dot_dimension_numbers<[1], [0], [0], [1], [0, 0, 1, 1], [], []>} : vector<2x32xf32>, vector<32x32xf32>, vector<2x32xf32> -> vector<2x32xf32>
    %c0_8 = arith.constant 0 : index
    %c0_9 = arith.constant 0 : index
    %10 = vector.load %arg5[%c0_8, %c0_9] : memref<1x32xf32, #tpu.memory_space<vmem>>, vector<1x32xf32>
    %11 = vector.broadcast %10 : vector<1x32xf32> to vector<2x32xf32>
    %12 = arith.addf %9, %11 : vector<2x32xf32>
    %13 = arith.mulf %12, %12 : vector<2x32xf32>
    %c0_10 = arith.constant 0 : index
    %c0_11 = arith.constant 0 : index
    %14 = vector.load %arg6[%c0_10, %c0_11] : memref<32x4xf32, #tpu.memory_space<vmem>>, vector<32x4xf32>
    %cst_12 = arith.constant dense<0.000000e+00> : vector<2x4xf32>
    %15 = tpu.matmul %13, %14, %cst_12 {dimension_numbers = #tpu.dot_dimension_numbers<[1], [0], [0], [1], [0, 0, 1, 1], [], []>} : vector<2x32xf32>, vector<32x4xf32>, vector<2x4xf32> -> vector<2x4xf32>
    %c0_13 = arith.constant 0 : index
    %c0_14 = arith.constant 0 : index
    %16 = vector.load %arg7[%c0_13, %c0_14] : memref<3x4xf32, #tpu.memory_space<vmem>>, vector<1x4xf32>
    %c1 = arith.constant 1 : index
    %c0_15 = arith.constant 0 : index
    %17 = vector.load %arg7[%c1, %c0_15] : memref<3x4xf32, #tpu.memory_space<vmem>>, vector<1x4xf32>
    %c2 = arith.constant 2 : index
    %c0_16 = arith.constant 0 : index
    %18 = vector.load %arg7[%c2, %c0_16] : memref<3x4xf32, #tpu.memory_space<vmem>>, vector<1x4xf32>
    %19 = vector.broadcast %18 : vector<1x4xf32> to vector<2x4xf32>
    %20 = arith.mulf %19, %15 : vector<2x4xf32>
    %21 = math.log1p %20 : vector<2x4xf32>
    %22 = vector.broadcast %17 : vector<1x4xf32> to vector<2x4xf32>
    %23 = arith.mulf %22, %21 : vector<2x4xf32>
    %24 = vector.broadcast %16 : vector<1x4xf32> to vector<2x4xf32>
    %25 = arith.subf %24, %23 : vector<2x4xf32>
    %c0_17 = arith.constant 0 : index
    %c0_18 = arith.constant 0 : index
    %26 = vector.load %arg8[%c0_17, %c0_18] : memref<2x4xf32, #tpu.memory_space<vmem>>, vector<2x4xf32>
    tpu.vector_store %arg8[%c0_17, %c0_18], %25 {strides = array<i32>} : memref<2x4xf32, #tpu.memory_space<vmem>>, vector<2x4xf32>,
    return
  }
  func.func @transform_0(%arg0: i32) -> (i32, i32) {
    %c0_i32 = arith.constant 0 : i32
    %c0_i32_0 = arith.constant 0 : i32
    return %arg0, %c0_i32 : i32, i32
  }
  func.func @transform_1(%arg0: i32) -> (i32, i32) {
    %c0_i32 = arith.constant 0 : i32
    %c0_i32_0 = arith.constant 0 : i32
    %c0_i32_1 = arith.constant 0 : i32
    return %c0_i32, %c0_i32_0 : i32, i32
  }
  func.func @transform_2(%arg0: i32) -> (i32, i32) {
    %c0_i32 = arith.constant 0 : i32
    %c0_i32_0 = arith.constant 0 : i32
    %c0_i32_1 = arith.constant 0 : i32
    return %c0_i32, %c0_i32_0 : i32, i32
  }
  func.func @transform_3(%arg0: i32) -> (i32, i32) {
    %c0_i32 = arith.constant 0 : i32
    %c0_i32_0 = arith.constant 0 : i32
    %c0_i32_1 = arith.constant 0 : i32
    return %c0_i32, %c0_i32_0 : i32, i32
  }
  func.func @transform_4(%arg0: i32) -> (i32, i32) {
    %c0_i32 = arith.constant 0 : i32
    %c0_i32_0 = arith.constant 0 : i32
    %c0_i32_1 = arith.constant 0 : i32
    return %c0_i32, %c0_i32_0 : i32, i32
  }
  func.func @transform_5(%arg0: i32) -> (i32, i32) {
    %c0_i32 = arith.constant 0 : i32
    %c0_i32_0 = arith.constant 0 : i32
    %c0_i32_1 = arith.constant 0 : i32
    return %c0_i32, %c0_i32_0 : i32, i32
  }
  func.func @transform_6(%arg0: i32) -> (i32, i32) {
    %c0_i32 = arith.constant 0 : i32
    %c0_i32_0 = arith.constant 0 : i32
    %c0_i32_1 = arith.constant 0 : i32
    return %c0_i32, %c0_i32_0 : i32, i32
  }
  func.func @transform_7(%arg0: i32) -> (i32, i32) {
    %c0_i32 = arith.constant 0 : i32
    %c0_i32_0 = arith.constant 0 : i32
    return %arg0, %c0_i32 : i32, i32
  }
}

</mosaic_0001>

<llo_original>
// kernel: protodpmm_forward.1
$region0: #{protodpmm_forward.1}
  #allocation0 [shape = 'u32[]', space=smem, size = 0x4, offset = 0x4, fixed_abs, tag = 'smem constant byte address 0x4 - core index']
  #allocation1 [shape = 'u32[144,128]{1,0:T(1,128)}', space=vmem, size = 0x12000, scoped, tag = 'internal scratch']
  %s0 = inlined_call_operand.vmem [shape: f32[2,1024], index: 0, kind: input, shape index: {}]
  %s1 = inlined_call_operand.vmem [shape: bf16[32,1024], index: 1, kind: input, shape index: {}]
  %s2 = inlined_call_operand.vmem [shape: f32[1,32], index: 2, kind: input, shape index: {}]
  %s3 = inlined_call_operand.vmem [shape: f32[32,32], index: 3, kind: input, shape index: {}]
  %s4 = inlined_call_operand.vmem [shape: f32[1,32], index: 4, kind: input, shape index: {}]
  %s5 = inlined_call_operand.vmem [shape: f32[32,4], index: 5, kind: input, shape index: {}]
  %s6 = inlined_call_operand.vmem [shape: f32[3,4], index: 6, kind: input, shape index: {}]
  %s7 = inlined_call_operand.hbm [shape: f32[2,4], index: 7, kind: output, shape index: {}]
  %s8 = sld [smem:[#allocation0]]
  $region38: #{protodpmm_forward.1} parent=0
    _
  %s10 = ssub.s32 1, %s8
  %s11 = scalar_select 0, %s10, %s8
  $region1: #{protodpmm_forward.1} parent=0
    #allocation2 [shape = 'u8[1024]{0}', space=vmem, size = 0x400, scoped, tag = 'output window, operand 0, single buffered']
    #allocation3 [shape = 's32[1]{0}', space=sflag, size = 0x4, scoped, tag = 'scoped memory for protodpmm_forward.1']
    %12 = vsyncpa [#allocation3], 0
    // Predicated region
    $region2: #{protodpmm_forward.1} parent=1 // pred_check
      _
    $region3: #{protodpmm_forward.1} parent=1 // pred_check_branch
      %14 = sbr.rel (0) target = $region5
    $region4: #{protodpmm_forward.1} parent=1 // pred_region
      _
    $region5: #{protodpmm_forward.1} parent=1 // pred_fallthru
      _
    // Predicated region
    $region6: #{protodpmm_forward.1} parent=1 // pred_check
      _
    $region7: #{protodpmm_forward.1} parent=1 // pred_check_branch
      %16 = sbr.rel (0) target = $region9
    $region8: #{protodpmm_forward.1} parent=1 // pred_region
      _
    $region9: #{protodpmm_forward.1} parent=1 // pred_fallthru
      _
    // Predicated region
    $region10: #{protodpmm_forward.1} parent=1 // pred_check
      _
    $region11: #{protodpmm_forward.1} parent=1 // pred_check_branch
      %18 = sbr.rel (0) target = $region13
    $region12: #{protodpmm_forward.1} parent=1 // pred_region
      _
    $region13: #{protodpmm_forward.1} parent=1 // pred_fallthru
      _
    // Predicated region
    $region14: #{protodpmm_forward.1} parent=1 // pred_check
      _
    $region15: #{protodpmm_forward.1} parent=1 // pred_check_branch
      %20 = sbr.rel (0) target = $region17
    $region16: #{protodpmm_forward.1} parent=1 // pred_region
      _
    $region17: #{protodpmm_forward.1} parent=1 // pred_fallthru
      _
    // Predicated region
    $region18: #{protodpmm_forward.1} parent=1 // pred_check
      _
    $region19: #{protodpmm_forward.1} parent=1 // pred_check_branch
      %22 = sbr.rel (0) target = $region21
    $region20: #{protodpmm_forward.1} parent=1 // pred_region
      _
    $region21: #{protodpmm_forward.1} parent=1 // pred_fallthru
      _
    // Predicated region
    $region22: #{protodpmm_forward.1} parent=1 // pred_check
      _
    $region23: #{protodpmm_forward.1} parent=1 // pred_check_branch
      %24 = sbr.rel (0) target = $region25
    $region24: #{protodpmm_forward.1} parent=1 // pred_region
      _
    $region25: #{protodpmm_forward.1} parent=1 // pred_fallthru
      _
    // Predicated region
    $region26: #{protodpmm_forward.1} parent=1 // pred_check
      _
    $region27: #{protodpmm_forward.1} parent=1 // pred_check_branch
      %26 = sbr.rel (0) target = $region29
    $region28: #{protodpmm_forward.1} parent=1 // pred_region
      _
    $region29: #{protodpmm_forward.1} parent=1 // pred_fallthru
      _
    %v28 = vld [vmem:[%s0] sm:$0xff]
    %v29 = vld [vmem:[%s0 + $0x8] sm:$0xff]
    %v32 = vcombine.high %v28, %v28
    %v34 = vunpack.c.l.s4 1983009808
    %v35 = vunpack.c.0.s8 %v34
    %v36 = vlaneseq
    %v37 = vshrl.u32 %v36, 7
    %v38 = vsub.s32 %v35, %v37
    %v39 = vrot.slane %v28, %v38
    %v41 = vunpack.c.l.s4 1983009808
    %v42 = vunpack.c.0.s8 %v41
    %v43 = vlaneseq
    %v44 = vshrl.u32 %v43, 7
    %v45 = vsub.s32 %v42, %v44
    %v46 = vrot.slane %v32, %v45
    %v47 = vcombine.high %v39, %v39
    %v48 = vcombine.high %v46, %v46
    %v49 = vcombine.high %v29, %v29
    %v51 = vunpack.c.l.s4 1983009808
    %v52 = vunpack.c.0.s8 %v51
    %v53 = vlaneseq
    %v54 = vshrl.u32 %v53, 7
    %v55 = vsub.s32 %v52, %v54
    %v56 = vrot.slane %v29, %v55
    %v58 = vunpack.c.l.s4 1983009808
    %v59 = vunpack.c.0.s8 %v58
    %v60 = vlaneseq
    %v61 = vshrl.u32 %v60, 7
    %v62 = vsub.s32 %v59, %v61
    %v63 = vrot.slane %v49, %v62
    %v64 = vcombine.high %v56, %v56
    %v65 = vcombine.high %v63, %v63
    %v74 = vpack.c.bf16 %v39, %v39
    %v75 = vpack.c.bf16 %v47, %v47
    %v76 = vpack.c.bf16 %v46, %v46
    %v77 = vpack.c.bf16 %v48, %v48
    %v78 = vpack.c.bf16 %v56, %v56
    %v79 = vpack.c.bf16 %v64, %v64
    %v80 = vpack.c.bf16 %v63, %v63
    %v81 = vpack.c.bf16 %v65, %v65
    %v82 = vld [vmem:[%s1] sm:$0xff]
    %v83 = vld [vmem:[%s1 + $0x8] sm:$0xff]
    %v84 = vld [vmem:[%s1 + $0x10] sm:$0xff]
    %v85 = vld [vmem:[%s1 + $0x18] sm:$0xff]
    %v86 = vld [vmem:[%s1 + $0x20] sm:$0xff]
    %v87 = vld [vmem:[%s1 + $0x28] sm:$0xff]
    %v88 = vld [vmem:[%s1 + $0x30] sm:$0xff]
    %v89 = vld [vmem:[%s1 + $0x38] sm:$0xff]
    %v90 = vld [vmem:[%s1 + $0x40] sm:$0xff]
    %v91 = vld [vmem:[%s1 + $0x48] sm:$0xff]
    %v92 = vld [vmem:[%s1 + $0x50] sm:$0xff]
    %v93 = vld [vmem:[%s1 + $0x58] sm:$0xff]
    %v94 = vld [vmem:[%s1 + $0x60] sm:$0xff]
    %v95 = vld [vmem:[%s1 + $0x68] sm:$0xff]
    %v96 = vld [vmem:[%s1 + $0x70] sm:$0xff]
    %v97 = vld [vmem:[%s1 + $0x78] sm:$0xff]
    %v98 = vld [vmem:[%s2] sm:$0x1]
    %v100 = vlaneseq
    %v101 = vshrl.u32 %v100, 7
    %v102 = vsub.s32 0, %v101
    %v103 = vrot.slane %v98, %v102
    %v121 = vunpack.c.l.b16 %v82
    %v122 = vunpack.c.h.b16 %v82
    %v123 = vunpack.c.l.b16 %v83
    %v124 = vunpack.c.h.b16 %v83
    %v125 = vunpack.c.l.b16 %v84
    %v126 = vunpack.c.h.b16 %v84
    %v127 = vunpack.c.l.b16 %v85
    %v128 = vunpack.c.h.b16 %v85
    %v129 = vunpack.c.l.b16 %v86
    %v130 = vunpack.c.h.b16 %v86
    %v131 = vunpack.c.l.b16 %v87
    %v132 = vunpack.c.h.b16 %v87
    %v133 = vunpack.c.l.b16 %v88
    %v134 = vunpack.c.h.b16 %v88
    %v135 = vunpack.c.l.b16 %v89
    %v136 = vunpack.c.h.b16 %v89
    %v137 = vunpack.c.l.b16 %v90
    %v138 = vunpack.c.h.b16 %v90
    %v139 = vunpack.c.l.b16 %v91
    %v140 = vunpack.c.h.b16 %v91
    %v141 = vunpack.c.l.b16 %v92
    %v142 = vunpack.c.h.b16 %v92
    %v143 = vunpack.c.l.b16 %v93
    %v144 = vunpack.c.h.b16 %v93
    %v145 = vunpack.c.l.b16 %v94
    %v146 = vunpack.c.h.b16 %v94
    %v147 = vunpack.c.l.b16 %v95
    %v148 = vunpack.c.h.b16 %v95
    %v149 = vunpack.c.l.b16 %v96
    %v150 = vunpack.c.h.b16 %v96
    %v151 = vunpack.c.l.b16 %v97
    %v152 = vunpack.c.h.b16 %v97
    %v153 = vpack.c.b16 %v129, %v121
    %v154 = vpack.c.b16 %v130, %v122
    %v155 = vpack.c.b16 %v131, %v123
    %v156 = vpack.c.b16 %v132, %v124
    %v157 = vpack.c.b16 %v133, %v125
    %v158 = vpack.c.b16 %v134, %v126
    %v159 = vpack.c.b16 %v135, %v127
    %v160 = vpack.c.b16 %v136, %v128
    %v161 = vpack.c.b16 %v145, %v137
    %v162 = vpack.c.b16 %v146, %v138
    %v163 = vpack.c.b16 %v147, %v139
    %v164 = vpack.c.b16 %v148, %v140
    %v165 = vpack.c.b16 %v149, %v141
    %v166 = vpack.c.b16 %v150, %v142
    %v167 = vpack.c.b16 %v151, %v143
    %v168 = vpack.c.b16 %v152, %v144
    %185 = vmatprep.subr.bf16.mxu0 %v154
    %186 = vmatpush1.bf16.xpose.msra.mxu0 %v153
    %187 = vmatprep.subr.bf16.mxu0 %v162
    %188 = vmatpush1.bf16.xpose.msra.mxu0 %v161
    %189 = vmatprep.subr.bf16.mxu0 0
    %190 = vmatpush1.bf16.xpose.msra.mxu0 0
    %191 = vmatprep.subr.bf16.mxu0 0
    %192 = vmatpush1.bf16.xpose.msra.mxu0 0
    %193 = vmatprep.subr.bf16.mxu0 0
    %194 = vmatpush1.bf16.xpose.msra.mxu0 0
    %195 = vmatprep.subr.bf16.mxu0 0
    %196 = vmatpush1.bf16.xpose.msra.mxu0 0
    %197 = vmatprep.subr.bf16.mxu0 0
    %198 = vmatpush1.bf16.xpose.msra.mxu0 0
    %199 = vmatprep.subr.bf16.mxu0 0
    %200 = vmatpush1.bf16.xpose.msra.mxu0 0
    %201 = vmatprep.subr.bf16.mxu0 0
    %202 = vmatpush1.bf16.xpose.msra.mxu0 0
    %203 = vmatprep.subr.bf16.mxu0 0
    %204 = vmatpush1.bf16.xpose.msra.mxu0 0
    %205 = vmatprep.subr.bf16.mxu0 0
    %206 = vmatpush1.bf16.xpose.msra.mxu0 0
    %207 = vmatprep.subr.bf16.mxu0 0
    %208 = vmatpush1.bf16.xpose.msra.mxu0 0
    %209 = vmatprep.subr.bf16.mxu0 0
    %210 = vmatpush1.bf16.xpose.msra.mxu0 0
    %211 = vmatprep.subr.bf16.mxu0 0
    %212 = vmatpush1.bf16.xpose.msra.mxu0 0
    %213 = vmatprep.subr.bf16.mxu0 0
    %214 = vmatpush1.bf16.xpose.msra.mxu0 0
    %215 = vmatprep.subr.bf16.mxu0 0
    %216 = vmatpush1.bf16.xpose.msra.mxu0 0
    %217 = vmatprep.mubr.bf16.mxu0 %v75
    %218 = vmatmul.mubr.bf16.gmra.mrb[0].mxu0 %v74
    %v219 = vpop.f32.mrb[0].mxu0
    %v220 = vadd.f32 %v103, %v219
    %v221 = vpop.f32.mrb[0].mxu0
    %v222 = vpop.f32.mrb[0].mxu0
    %v223 = vpop.f32.mrb[0].mxu0
    %224 = vdwg.mxu0
    %225 = vmatprep.subr.bf16.mxu0 %v156
    %226 = vmatpush1.bf16.xpose.msra.mxu0 %v155
    %227 = vmatprep.subr.bf16.mxu0 %v164
    %228 = vmatpush1.bf16.xpose.msra.mxu0 %v163
    %229 = vmatprep.subr.bf16.mxu0 0
    %230 = vmatpush1.bf16.xpose.msra.mxu0 0
    %231 = vmatprep.subr.bf16.mxu0 0
    %232 = vmatpush1.bf16.xpose.msra.mxu0 0
    %233 = vmatprep.subr.bf16.mxu0 0
    %234 = vmatpush1.bf16.xpose.msra.mxu0 0
    %235 = vmatprep.subr.bf16.mxu0 0
    %236 = vmatpush1.bf16.xpose.msra.mxu0 0
    %237 = vmatprep.subr.bf16.mxu0 0
    %238 = vmatpush1.bf16.xpose.msra.mxu0 0
    %239 = vmatprep.subr.bf16.mxu0 0
    %240 = vmatpush1.bf16.xpose.msra.mxu0 0
    %241 = vmatprep.subr.bf16.mxu0 0
    %242 = vmatpush1.bf16.xpose.msra.mxu0 0
    %243 = vmatprep.subr.bf16.mxu0 0
    %244 = vmatpush1.bf16.xpose.msra.mxu0 0
    %245 = vmatprep.subr.bf16.mxu0 0
    %246 = vmatpush1.bf16.xpose.msra.mxu0 0
    %247 = vmatprep.subr.bf16.mxu0 0
    %248 = vmatpush1.bf16.xpose.msra.mxu0 0
    %249 = vmatprep.subr.bf16.mxu0 0
    %250 = vmatpush1.bf16.xpose.msra.mxu0 0
    %251 = vmatprep.subr.bf16.mxu0 0
    %252 = vmatpush1.bf16.xpose.msra.mxu0 0
    %253 = vmatprep.subr.bf16.mxu0 0
    %254 = vmatpush1.bf16.xpose.msra.mxu0 0
    %255 = vmatprep.subr.bf16.mxu0 0
    %256 = vmatpush1.bf16.xpose.msra.mxu0 0
    %257 = vmatprep.mubr.bf16.mxu0 %v77
    %258 = vmatmul.mubr.bf16.gmra.mrb[0].mxu0 %v76
    %v259 = vpop.f32.mrb[0].mxu0
    %v260 = vadd.f32 %v220, %v259
    %v261 = vpop.f32.mrb[0].mxu0
    %v262 = vpop.f32.mrb[0].mxu0
    %v263 = vpop.f32.mrb[0].mxu0
    %264 = vdwg.mxu0
    %265 = vmatprep.subr.bf16.mxu0 %v158
    %266 = vmatpush1.bf16.xpose.msra.mxu0 %v157
    %267 = vmatprep.subr.bf16.mxu0 %v166
    %268 = vmatpush1.bf16.xpose.msra.mxu0 %v165
    %269 = vmatprep.subr.bf16.mxu0 0
    %270 = vmatpush1.bf16.xpose.msra.mxu0 0
    %271 = vmatprep.subr.bf16.mxu0 0
    %272 = vmatpush1.bf16.xpose.msra.mxu0 0
    %273 = vmatprep.subr.bf16.mxu0 0
    %274 = vmatpush1.bf16.xpose.msra.mxu0 0
    %275 = vmatprep.subr.bf16.mxu0 0
    %276 = vmatpush1.bf16.xpose.msra.mxu0 0
    %277 = vmatprep.subr.bf16.mxu0 0
    %278 = vmatpush1.bf16.xpose.msra.mxu0 0
    %279 = vmatprep.subr.bf16.mxu0 0
    %280 = vmatpush1.bf16.xpose.msra.mxu0 0
    %281 = vmatprep.subr.bf16.mxu0 0
    %282 = vmatpush1.bf16.xpose.msra.mxu0 0
    %283 = vmatprep.subr.bf16.mxu0 0
    %284 = vmatpush1.bf16.xpose.msra.mxu0 0
    %285 = vmatprep.subr.bf16.mxu0 0
    %286 = vmatpush1.bf16.xpose.msra.mxu0 0
    %287 = vmatprep.subr.bf16.mxu0 0
    %288 = vmatpush1.bf16.xpose.msra.mxu0 0
    %289 = vmatprep.subr.bf16.mxu0 0
    %290 = vmatpush1.bf16.xpose.msra.mxu0 0
    %291 = vmatprep.subr.bf16.mxu0 0
    %292 = vmatpush1.bf16.xpose.msra.mxu0 0
    %293 = vmatprep.subr.bf16.mxu0 0
    %294 = vmatpush1.bf16.xpose.msra.mxu0 0
    %295 = vmatprep.subr.bf16.mxu0 0
    %296 = vmatpush1.bf16.xpose.msra.mxu0 0
    %297 = vmatprep.mubr.bf16.mxu0 %v79
    %298 = vmatmul.mubr.bf16.gmra.mrb[0].mxu0 %v78
    %v299 = vpop.f32.mrb[0].mxu0
    %v300 = vadd.f32 %v260, %v299
    %v301 = vpop.f32.mrb[0].mxu0
    %v302 = vpop.f32.mrb[0].mxu0
    %v303 = vpop.f32.mrb[0].mxu0
    %304 = vdwg.mxu0
    %305 = vmatprep.subr.bf16.mxu0 %v160
    %306 = vmatpush1.bf16.xpose.msra.mxu0 %v159
    %307 = vmatprep.subr.bf16.mxu0 %v168
    %308 = vmatpush1.bf16.xpose.msra.mxu0 %v167
    %309 = vmatprep.subr.bf16.mxu0 0
    %310 = vmatpush1.bf16.xpose.msra.mxu0 0
    %311 = vmatprep.subr.bf16.mxu0 0
    %312 = vmatpush1.bf16.xpose.msra.mxu0 0
    %313 = vmatprep.subr.bf16.mxu0 0
    %314 = vmatpush1.bf16.xpose.msra.mxu0 0
    %315 = vmatprep.subr.bf16.mxu0 0
    %316 = vmatpush1.bf16.xpose.msra.mxu0 0
    %317 = vmatprep.subr.bf16.mxu0 0
    %318 = vmatpush1.bf16.xpose.msra.mxu0 0
    %319 = vmatprep.subr.bf16.mxu0 0
    %320 = vmatpush1.bf16.xpose.msra.mxu0 0
    %321 = vmatprep.subr.bf16.mxu0 0
    %322 = vmatpush1.bf16.xpose.msra.mxu0 0
    %323 = vmatprep.subr.bf16.mxu0 0
    %324 = vmatpush1.bf16.xpose.msra.mxu0 0
    %325 = vmatprep.subr.bf16.mxu0 0
    %326 = vmatpush1.bf16.xpose.msra.mxu0 0
    %327 = vmatprep.subr.bf16.mxu0 0
    %328 = vmatpush1.bf16.xpose.msra.mxu0 0
    %329 = vmatprep.subr.bf16.mxu0 0
    %330 = vmatpush1.bf16.xpose.msra.mxu0 0
    %331 = vmatprep.subr.bf16.mxu0 0
    %332 = vmatpush1.bf16.xpose.msra.mxu0 0
    %333 = vmatprep.subr.bf16.mxu0 0
    %334 = vmatpush1.bf16.xpose.msra.mxu0 0
    %335 = vmatprep.subr.bf16.mxu0 0
    %336 = vmatpush1.bf16.xpose.msra.mxu0 0
    %337 = vmatprep.mubr.bf16.mxu0 %v81
    %338 = vmatmul.mubr.bf16.gmra.mrb[0].mxu0 %v80
    %v339 = vpop.f32.mrb[0].mxu0
    %v340 = vadd.f32 %v300, %v339
    %v341 = vpop.f32.mrb[0].mxu0
    %v342 = vpop.f32.mrb[0].mxu0
    %v343 = vpop.f32.mrb[0].mxu0
    %344 = vdwg.mxu0
    %v345 = vtanh.pop %v340
    %v346 = vld [vmem:[%s3] sm:$0xff]
    %v347 = vld [vmem:[%s3 + $0x8] sm:$0xff]
    %v348 = vld [vmem:[%s3 + $0x10] sm:$0xff]
    %v349 = vld [vmem:[%s3 + $0x18] sm:$0xff]
    %v350 = vld [vmem:[%s4] sm:$0x1]
    %v352 = vlaneseq
    %v353 = vshrl.u32 %v352, 7
    %v354 = vsub.s32 0, %v353
    %v355 = vrot.slane %v350, %v354
    %vm357 = vcmask 261120
    %v359 = vsel %vm357, %v345, 0
    %361 = vmatprep.subr.mxu0 0.0
    %362 = vmatpush1.msra.mxu0 %v346
    %363 = vmatprep.subr.mxu0 0.0
    %364 = vmatpush1.msra.mxu0 %v347
    %365 = vmatprep.subr.mxu0 0.0
    %366 = vmatpush1.msra.mxu0 %v348
    %367 = vmatprep.subr.mxu0 0.0
    %368 = vmatpush1.msra.mxu0 %v349
    %369 = vmatprep.subr.mxu0 0.0
    %370 = vmatpush1.msra.mxu0 0.0
    %371 = vmatprep.subr.mxu0 0.0
    %372 = vmatpush1.msra.mxu0 0.0
    %373 = vmatprep.subr.mxu0 0.0
    %374 = vmatpush1.msra.mxu0 0.0
    %375 = vmatprep.subr.mxu0 0.0
    %376 = vmatpush1.msra.mxu0 0.0
    %377 = vmatprep.subr.mxu0 0.0
    %378 = vmatpush1.msra.mxu0 0.0
    %379 = vmatprep.subr.mxu0 0.0
    %380 = vmatpush1.msra.mxu0 0.0
    %381 = vmatprep.subr.mxu0 0.0
    %382 = vmatpush1.msra.mxu0 0.0
    %383 = vmatprep.subr.mxu0 0.0
    %384 = vmatpush1.msra.mxu0 0.0
    %385 = vmatprep.subr.mxu0 0.0
    %386 = vmatpush1.msra.mxu0 0.0
    %387 = vmatprep.subr.mxu0 0.0
    %388 = vmatpush1.msra.mxu0 0.0
    %389 = vmatprep.subr.mxu0 0.0
    %390 = vmatpush1.msra.mxu0 0.0
    %391 = vmatprep.subr.mxu0 0.0
    %392 = vmatpush1.msra.mxu0 0.0
    %393 = vmatprep.subr.mxu0 0.0
    %394 = vmatpush1.msra.mxu0 0.0
    %395 = vmatprep.subr.mxu0 0.0
    %396 = vmatpush1.msra.mxu0 0.0
    %397 = vmatprep.subr.mxu0 0.0
    %398 = vmatpush1.msra.mxu0 0.0
    %399 = vmatprep.subr.mxu0 0.0
    %400 = vmatpush1.msra.mxu0 0.0
    %401 = vmatprep.subr.mxu0 0.0
    %402 = vmatpush1.msra.mxu0 0.0
    %403 = vmatprep.subr.mxu0 0.0
    %404 = vmatpush1.msra.mxu0 0.0
    %405 = vmatprep.subr.mxu0 0.0
    %406 = vmatpush1.msra.mxu0 0.0
    %407 = vmatprep.subr.mxu0 0.0
    %408 = vmatpush1.msra.mxu0 0.0
    %409 = vmatprep.subr.mxu0 0.0
    %410 = vmatpush1.msra.mxu0 0.0
    %411 = vmatprep.subr.mxu0 0.0
    %412 = vmatpush1.msra.mxu0 0.0
    %413 = vmatprep.subr.mxu0 0.0
    %414 = vmatpush1.msra.mxu0 0.0
    %415 = vmatprep.subr.mxu0 0.0
    %416 = vmatpush1.msra.mxu0 0.0
    %417 = vmatprep.subr.mxu0 0.0
    %418 = vmatpush1.msra.mxu0 0.0
    %419 = vmatprep.subr.mxu0 0.0
    %420 = vmatpush1.msra.mxu0 0.0
    %421 = vmatprep.subr.mxu0 0.0
    %422 = vmatpush1.msra.mxu0 0.0
    %423 = vmatprep.subr.mxu0 0.0
    %424 = vmatpush1.msra.mxu0 0.0
    %425 = vmatprep.mubr.f32.mxu0 0.0
    %426 = vmatmul.mubr.f32.gmra.mrb[0].mxu0 %v359
    %v427 = vpop.f32.mrb[0].mxu0
    %v428 = vadd.f32 %v355, %v427
    %v429 = vpop.f32.mrb[0].mxu0
    %430 = vdwg.mxu0
    %v431 = vmul.f32 %v428, %v428
    %v432 = vld [vmem:[%s5] sm:$0xff]
    %v433 = vld [vmem:[%s5 + $0x8] sm:$0xff]
    %v434 = vld [vmem:[%s5 + $0x10] sm:$0xff]
    %v435 = vld [vmem:[%s5 + $0x18] sm:$0xff]
    %v437 = vsel %vm357, %v431, 0
    %439 = vmatprep.subr.mxu0 0.0
    %440 = vmatpush1.msra.mxu0 %v432
    %441 = vmatprep.subr.mxu0 0.0
    %442 = vmatpush1.msra.mxu0 %v433
    %443 = vmatprep.subr.mxu0 0.0
    %444 = vmatpush1.msra.mxu0 %v434
    %445 = vmatprep.subr.mxu0 0.0
    %446 = vmatpush1.msra.mxu0 %v435
    %447 = vmatprep.subr.mxu0 0.0
    %448 = vmatpush1.msra.mxu0 0.0
    %449 = vmatprep.subr.mxu0 0.0
    %450 = vmatpush1.msra.mxu0 0.0
    %451 = vmatprep.subr.mxu0 0.0
    %452 = vmatpush1.msra.mxu0 0.0
    %453 = vmatprep.subr.mxu0 0.0
    %454 = vmatpush1.msra.mxu0 0.0
    %455 = vmatprep.subr.mxu0 0.0
    %456 = vmatpush1.msra.mxu0 0.0
    %457 = vmatprep.subr.mxu0 0.0
    %458 = vmatpush1.msra.mxu0 0.0
    %459 = vmatprep.subr.mxu0 0.0
    %460 = vmatpush1.msra.mxu0 0.0
    %461 = vmatprep.subr.mxu0 0.0
    %462 = vmatpush1.msra.mxu0 0.0
    %463 = vmatprep.subr.mxu0 0.0
    %464 = vmatpush1.msra.mxu0 0.0
    %465 = vmatprep.subr.mxu0 0.0
    %466 = vmatpush1.msra.mxu0 0.0
    %467 = vmatprep.subr.mxu0 0.0
    %468 = vmatpush1.msra.mxu0 0.0
    %469 = vmatprep.subr.mxu0 0.0
    %470 = vmatpush1.msra.mxu0 0.0
    %471 = vmatprep.subr.mxu0 0.0
    %472 = vmatpush1.msra.mxu0 0.0
    %473 = vmatprep.subr.mxu0 0.0
    %474 = vmatpush1.msra.mxu0 0.0
    %475 = vmatprep.subr.mxu0 0.0
    %476 = vmatpush1.msra.mxu0 0.0
    %477 = vmatprep.subr.mxu0 0.0
    %478 = vmatpush1.msra.mxu0 0.0
    %479 = vmatprep.subr.mxu0 0.0
    %480 = vmatpush1.msra.mxu0 0.0
    %481 = vmatprep.subr.mxu0 0.0
    %482 = vmatpush1.msra.mxu0 0.0
    %483 = vmatprep.subr.mxu0 0.0
    %484 = vmatpush1.msra.mxu0 0.0
    %485 = vmatprep.subr.mxu0 0.0
    %486 = vmatpush1.msra.mxu0 0.0
    %487 = vmatprep.subr.mxu0 0.0
    %488 = vmatpush1.msra.mxu0 0.0
    %489 = vmatprep.subr.mxu0 0.0
    %490 = vmatpush1.msra.mxu0 0.0
    %491 = vmatprep.subr.mxu0 0.0
    %492 = vmatpush1.msra.mxu0 0.0
    %493 = vmatprep.subr.mxu0 0.0
    %494 = vmatpush1.msra.mxu0 0.0
    %495 = vmatprep.subr.mxu0 0.0
    %496 = vmatpush1.msra.mxu0 0.0
    %497 = vmatprep.subr.mxu0 0.0
    %498 = vmatpush1.msra.mxu0 0.0
    %499 = vmatprep.subr.mxu0 0.0
    %500 = vmatpush1.msra.mxu0 0.0
    %501 = vmatprep.subr.mxu0 0.0
    %502 = vmatpush1.msra.mxu0 0.0
    %503 = vmatprep.mubr.f32.mxu0 0.0
    %504 = vmatmul.mubr.f32.gmra.mrb[0].mxu0 %v437
    %v505 = vpop.f32.mrb[0].mxu0
    %v506 = vadd.f32 0.0, %v505
    %v507 = vpop.f32.mrb[0].mxu0
    %508 = vdwg.mxu0
    %v509 = vld [vmem:[%s6] sm:$0x1]
    %v510 = vld [vmem:[%s6 + $0x1] sm:$0x1]
    %v511 = vld [vmem:[%s6 + $0x2] sm:$0x1]
    %v512 = vlaneseq
    %v513 = vshrl.u32 %v512, 7
    %v514 = vsub.s32 0, %v513
    %v515 = vrot.slane %v511, %v514
    %v516 = vmul.f32 %v515, %v506
    %v517 = vadd.f32 %v516, 1.0
    %v518 = vlog2.pop %v517
    %v519 = vmul.f32 %v518, 0.6931472
    %v520 = vmul.f32 -0.5, %v516
    %v521 = vadd.f32 %v520, 1.0
    %v522 = vmul.f32 %v521, %v516
    %v523 = vand.u32 2147483647, %v516
    %vm524 = vcmp.lt.f32.partialorder %v523, 0.0004427343
    %v525 = vsel %vm524, %v522, %v519
    %v526 = vlaneseq
    %v527 = vshrl.u32 %v526, 7
    %v528 = vsub.s32 0, %v527
    %v529 = vrot.slane %v510, %v528
    %v530 = vmul.f32 %v529, %v525
    %v531 = vlaneseq
    %v532 = vshrl.u32 %v531, 7
    %v533 = vsub.s32 0, %v532
    %v534 = vrot.slane %v509, %v533
    %v535 = vsub.f32 %v534, %v530
    %vm536 = vcmask 25600
    %537 = vst.msk [vmem:[#allocation2] sm:$0x3] %vm536, %v535
    // Predicated region
    $region30: #{protodpmm_forward.1} parent=1 // pred_check
      _
    $region31: #{protodpmm_forward.1} parent=1 // pred_check_branch
      %539 = sbr.rel (0) target = $region33
    $region32: #{protodpmm_forward.1} parent=1 // pred_region
      %s541 = ssub.s32 32, 32
      %542 = vsyncadd [#allocation3], %s541
      %s544 = sshll.u32 [#allocation2], 4
      %s545 = int_to_ptr.vmem [resolvable:$true] %s544
      %547 = dma.vmem_to_hbm [thread:$0]  %s545, 32, %s7, [#allocation3]
    $region33: #{protodpmm_forward.1} parent=1 // pred_fallthru
      _
    // Predicated region
    $region34: #{protodpmm_forward.1} parent=1 // pred_check
      _
    $region35: #{protodpmm_forward.1} parent=1 // pred_check_branch
      %549 = sbr.rel (0) target = $region37
    $region36: #{protodpmm_forward.1} parent=1 // pred_region
      %550 = dma.done [#allocation3], 32
    $region37: #{protodpmm_forward.1} parent=1 // pred_fallthru
      _
    %551 = vsyncpa [#allocation3], 1

</llo_original>
